<compile_context>
chip_gen: v5e
topology: v5e:2x2
jax: 0.10.0
libtpu: 0.0.40
codegen_flags: <defaults>
</compile_context>

<pallas_src>
import functools
import math

import jax
import jax.numpy as jnp
from jax import lax
from jax.experimental import pallas as pl
from jax.experimental.pallas import tpu as pltpu


def _round_up(x: int, m: int) -> int:
    return (x + m - 1) // m * m


# Contract the last dim of both operands (x @ W^T style, native (out, in) weights).
_CONTRACT_LAST = (((1,), (1,)), ((), ()))


def _lora_kernel_f32_out(x_ref, w_ref, b_ref, ax_ref, bb_ref, o_ref, *, scaling):
    """f32-output variant: accumulate directly into the resident output block."""
    k = pl.program_id(2)

    @pl.when(k == 0)
    def _():
        o_ref[...] = jnp.zeros_like(o_ref)

    # Base path:  x (tm, tk) contracted with W (tn, tk) over K.
    o_ref[...] += lax.dot_general(
        x_ref[...], w_ref[...], dimension_numbers=_CONTRACT_LAST,
        preferred_element_type=jnp.float32)

    # Epilogue (once per output tile): LoRA-B matmul, bias, scaling.
    @pl.when(k == pl.num_programs(2) - 1)
    def _():
        lora = lax.dot_general(
            ax_ref[...], bb_ref[...], dimension_numbers=_CONTRACT_LAST,
            preferred_element_type=jnp.float32)
        o_ref[...] = o_ref[...] + b_ref[...] + lora * scaling


def _lora_kernel_acc(x_ref, w_ref, b_ref, ax_ref, bb_ref, o_ref, acc_ref, *, scaling):
    """Generic variant (non-f32 output): accumulate in an f32 VMEM scratch."""
    k = pl.program_id(2)

    @pl.when(k == 0)
    def _():
        acc_ref[...] = jnp.zeros_like(acc_ref)

    acc_ref[...] += lax.dot_general(
        x_ref[...], w_ref[...], dimension_numbers=_CONTRACT_LAST,
        preferred_element_type=jnp.float32)

    @pl.when(k == pl.num_programs(2) - 1)
    def _():
        lora = lax.dot_general(
            ax_ref[...], bb_ref[...], dimension_numbers=_CONTRACT_LAST,
            preferred_element_type=jnp.float32)
        out = acc_ref[...] + b_ref[...] + lora * scaling
        o_ref[...] = out.astype(o_ref.dtype)


def make_lora_linear(w, b, lora_a, lora_b, scaling, *,
                     compute_dtype=jnp.bfloat16,
                     tm: int = 512, tn: int = 512, tk: int = 1024):
    """Build a LoRA-linear forward fn; weights are padded/cast ONCE here.

    w:      (out_features, in_features)  -- base nn.Linear weight (native layout)
    b:      (out_features,)              -- base nn.Linear bias
    lora_a: (r, in_features)             -- lora_A weight (native layout)
    lora_b: (out_features, r)            -- lora_B weight (native layout)
    """
    out_features, in_features = w.shape
    r = lora_a.shape[0]
    scaling = float(scaling)

    n_aligned = _round_up(out_features, 128)
    k_aligned = _round_up(in_features, 128)
    tn = min(tn, n_aligned)
    tk = min(tk, k_aligned)
    # v7x megacore: parallel grid axes are sharded across the 2 TensorCores.
    # Prefer >= 2 N blocks so a single-M-tile (small batch) call still uses both.
    if n_aligned // tn < 2 and n_aligned % 256 == 0:
        tn = n_aligned // 2

    n_pad = _round_up(out_features, tn)
    k_pad = _round_up(in_features, tk)
    r_pad = _round_up(r, 128)  # lane-align the LoRA rank (zero columns are inert)

    # One-time weight preparation (outside the per-call path): pad + cast.
    w_p = jnp.pad(w.astype(compute_dtype),
                  ((0, n_pad - out_features), (0, k_pad - in_features)))
    bb_p = jnp.pad(lora_b.astype(compute_dtype),
                   ((0, n_pad - out_features), (0, r_pad - r)))
    b_p = jnp.pad(b, (0, n_pad - out_features)).astype(jnp.float32).reshape(1, n_pad)
    a_cd = lora_a.astype(compute_dtype)  # unpadded; LoRA-A runs in plain XLA

    # TODO(synk): fp8 weight storage for v7x serving and adapter merge/unmerge
    # bookkeeping are out of scope for this forward kernel.

    def forward(x):
        *lead, k_in = x.shape
        assert k_in == in_features
        out_dtype = x.dtype
        m = math.prod(lead) if lead else 1
        tm_eff = min(tm, _round_up(m, 8))
        m_pad = _round_up(m, tm_eff)

        x2d = x.reshape(m, in_features).astype(compute_dtype)
        # TODO(synk): lora_dropout with p > 0 would be applied to x2d here.

        # LoRA-A product (M, r): trivial FLOPs, computed once in plain XLA
        # instead of being recomputed (rank-padded to 128) every K step.
        ax = lax.dot_general(x2d, a_cd, dimension_numbers=_CONTRACT_LAST,
                             preferred_element_type=jnp.float32)
        ax = ax.astype(compute_dtype)

        # Only the (cheap) activation-side arrays are padded per call.
        x_p = jnp.pad(x2d, ((0, m_pad - m), (0, k_pad - in_features)))
        ax_p = jnp.pad(ax, ((0, m_pad - m), (0, r_pad - r)))

        grid = (m_pad // tm_eff, n_pad // tn, k_pad // tk)

        if jnp.dtype(out_dtype) == jnp.dtype(jnp.float32):
            kernel = functools.partial(_lora_kernel_f32_out, scaling=scaling)
            scratch_shapes = []
        else:
            kernel = functools.partial(_lora_kernel_acc, scaling=scaling)
            scratch_shapes = [pltpu.VMEM((tm_eff, tn), jnp.float32)]

        out = pl.pallas_call(
            kernel,
            out_shape=jax.ShapeDtypeStruct((m_pad, n_pad), out_dtype),
            grid_spec=pltpu.PrefetchScalarGridSpec(
                num_scalar_prefetch=0,
                grid=grid,
                in_specs=[
                    pl.BlockSpec((tm_eff, tk), lambda i, j, k: (i, k)),     # x
                    pl.BlockSpec((tn, tk), lambda i, j, k: (j, k)),         # W (out,in)
                    pl.BlockSpec((1, tn), lambda i, j, k: (0, j)),          # bias
                    pl.BlockSpec((tm_eff, r_pad), lambda i, j, k: (i, 0)),  # x @ A^T
                    pl.BlockSpec((tn, r_pad), lambda i, j, k: (j, 0)),      # lora_B
                ],
                out_specs=pl.BlockSpec((tm_eff, tn), lambda i, j, k: (i, j)),
                scratch_shapes=scratch_shapes,
            ),
            compiler_params=pltpu.CompilerParams(
                dimension_semantics=("parallel", "parallel", "arbitrary"),
                # Fits within v7x's 64 MiB physical VMEM; ample on v5e/v6e.
                vmem_limit_bytes=48 * 1024 * 1024,
            ),
        )(x_p, w_p, b_p, ax_p, bb_p)

        out = out[:m, :out_features]
        return out.reshape(*lead, out_features)

    return forward


def lora_linear_ref(x, w, b, lora_a, lora_b, scaling):
    base = x @ w.T + b
    lora = (x @ lora_a.T) @ lora_b.T
    return base + lora * scaling


if __name__ == "__main__":
    # Shapes implied by the module: base nn.Linear(in_features, out_features),
    # lora_A: Linear(in, r, bias=False), lora_B: Linear(r, out, bias=False).
    batch, seq = 2, 8
    in_features, out_features, r = 32, 32, 8
    lora_alpha = 16
    scaling = lora_alpha / r

    key = jax.random.PRNGKey(0)
    kx, kw, kb, ka, kbb = jax.random.split(key, 5)

    x = jax.random.normal(kx, (batch, seq, in_features), dtype=jnp.float32)
    bound_w = 1.0 / (in_features ** 0.5)
    w = jax.random.uniform(kw, (out_features, in_features),
                           minval=-bound_w, maxval=bound_w, dtype=jnp.float32)
    b = jax.random.uniform(kb, (out_features,),
                           minval=-bound_w, maxval=bound_w, dtype=jnp.float32)
    # init_lora_weights=False semantics (nn.Linear default init) so the adapter
    # path is actually exercised (the default True would zero lora_B).
    bound_a = 1.0 / (in_features ** 0.5)
    bound_b = 1.0 / (r ** 0.5)
    lora_a = jax.random.uniform(ka, (r, in_features),
                                minval=-bound_a, maxval=bound_a, dtype=jnp.float32)
    lora_b = jax.random.uniform(kbb, (out_features, r),
                                minval=-bound_b, maxval=bound_b, dtype=jnp.float32)

    ref = lora_linear_ref(x, w, b, lora_a, lora_b, scaling)

    # 1) f32 compute / f32 activations: direct-into-output kernel, tight check.
    fwd_f32 = jax.jit(make_lora_linear(w, b, lora_a, lora_b, scaling,
                                       compute_dtype=jnp.float32))
    out_f32 = jax.block_until_ready(fwd_f32(x))
    assert out_f32.shape == (batch, seq, out_features)
    assert jnp.allclose(out_f32, ref, atol=1e-4, rtol=1e-4), \
        f"f32 max abs err = {jnp.max(jnp.abs(out_f32 - ref))}"

    # 2) bf16 compute / bf16 activations: scratch-accumulator kernel, loose check.
    fwd_bf16 = jax.jit(make_lora_linear(w, b, lora_a, lora_b, scaling,
                                        compute_dtype=jnp.bfloat16))
    out_bf16 = jax.block_until_ready(fwd_bf16(x.astype(jnp.bfloat16)))
    assert out_bf16.dtype == jnp.bfloat16
    assert out_bf16.shape == (batch, seq, out_features)
    err = jnp.max(jnp.abs(out_bf16.astype(jnp.float32) - ref))
    assert jnp.allclose(out_bf16.astype(jnp.float32), ref, atol=5e-2, rtol=5e-2), \
        f"bf16 max abs err = {err}"

    print("KERNEL_OK")
</pallas_src>

<mosaic_0001>
module attributes {stable_mosaic.version = 11 : i64} {
  func.func @_lora_kernel_f32_out(%arg0: i32, %arg1: i32, %arg2: i32, %arg3: memref<16x128xf32, #tpu.memory_space<vmem>>, %arg4: memref<128x128xf32, #tpu.memory_space<vmem>>, %arg5: memref<1x128xf32, #tpu.memory_space<vmem>>, %arg6: memref<16x128xf32, #tpu.memory_space<vmem>>, %arg7: memref<128x128xf32, #tpu.memory_space<vmem>>, %arg8: memref<16x128xf32, #tpu.memory_space<vmem>>) attributes {dimension_semantics = [#tpu.dimension_semantics<parallel>, #tpu.dimension_semantics<parallel>, #tpu.dimension_semantics<arbitrary>], iteration_bounds = array<i64: 1, 1, 1>, scalar_prefetch = 0 : i64, scratch_operands = 0 : i64, tpu.core_type = #tpu.core_type<tc>, window_params = [{transform_indices = @transform_0, window_bounds = array<i64: 16, 128>}, {transform_indices = @transform_1, window_bounds = array<i64: 128, 128>}, {transform_indices = @transform_2, window_bounds = array<i64: 1, 128>}, {transform_indices = @transform_3, window_bounds = array<i64: 16, 128>}, {transform_indices = @transform_4, window_bounds = array<i64: 128, 128>}, {transform_indices = @transform_5, window_bounds = array<i64: 16, 128>}]} {
    %c0_i32 = arith.constant 0 : i32
    %0 = arith.cmpi eq, %arg2, %c0_i32 : i32
    %1 = arith.extui %0 : i1 to i32
    %c0_i32_0 = arith.constant 0 : i32
    %2 = arith.cmpi ne, %1, %c0_i32_0 : i32
    scf.if %2 {
      %cst_10 = arith.constant 0.000000e+00 : f32
      %12 = vector.broadcast %cst_10 : f32 to vector<16x128xf32>
      %c0_11 = arith.constant 0 : index
      %c0_12 = arith.constant 0 : index
      %13 = vector.load %arg8[%c0_11, %c0_12] : memref<16x128xf32, #tpu.memory_space<vmem>>, vector<16x128xf32>
      tpu.vector_store %arg8[%c0_11, %c0_12], %12 {strides = array<i32>} : memref<16x128xf32, #tpu.memory_space<vmem>>, vector<16x128xf32>,
    } else {
    }
    %c0 = arith.constant 0 : index
    %c0_1 = arith.constant 0 : index
    %3 = vector.load %arg8[%c0, %c0_1] : memref<16x128xf32, #tpu.memory_space<vmem>>, vector<16x128xf32>
    %c0_2 = arith.constant 0 : index
    %c0_3 = arith.constant 0 : index
    %4 = vector.load %arg3[%c0_2, %c0_3] : memref<16x128xf32, #tpu.memory_space<vmem>>, vector<16x128xf32>
    %c0_4 = arith.constant 0 : index
    %c0_5 = arith.constant 0 : index
    %5 = vector.load %arg4[%c0_4, %c0_5] : memref<128x128xf32, #tpu.memory_space<vmem>>, vector<128x128xf32>
    %cst = arith.constant dense<0.000000e+00> : vector<16x128xf32>
    %6 = tpu.matmul %4, %5, %cst {dimension_numbers = #tpu.dot_dimension_numbers<[1], [1], [0], [0], [0, 0, 1, 0], [], []>} : vector<16x128xf32>, vector<128x128xf32>, vector<16x128xf32> -> vector<16x128xf32>
    %7 = arith.addf %3, %6 : vector<16x128xf32>
    %c0_6 = arith.constant 0 : index
    %c0_7 = arith.constant 0 : index
    %8 = vector.load %arg8[%c0_6, %c0_7] : memref<16x128xf32, #tpu.memory_space<vmem>>, vector<16x128xf32>
    tpu.vector_store %arg8[%c0_6, %c0_7], %7 {strides = array<i32>} : memref<16x128xf32, #tpu.memory_space<vmem>>, vector<16x128xf32>,
    %c0_i32_8 = arith.constant 0 : i32
    %9 = arith.cmpi eq, %arg2, %c0_i32_8 : i32
    %10 = arith.extui %9 : i1 to i32
    %c0_i32_9 = arith.constant 0 : i32
    %11 = arith.cmpi ne, %10, %c0_i32_9 : i32
    scf.if %11 {
      %c0_10 = arith.constant 0 : index
      %c0_11 = arith.constant 0 : index
      %12 = vector.load %arg6[%c0_10, %c0_11] : memref<16x128xf32, #tpu.memory_space<vmem>>, vector<16x128xf32>
      %c0_12 = arith.constant 0 : index
      %c0_13 = arith.constant 0 : index
      %13 = vector.load %arg7[%c0_12, %c0_13] : memref<128x128xf32, #tpu.memory_space<vmem>>, vector<128x128xf32>
      %cst_14 = arith.constant dense<0.000000e+00> : vector<16x128xf32>
      %14 = tpu.matmul %12, %13, %cst_14 {dimension_numbers = #tpu.dot_dimension_numbers<[1], [1], [0], [0], [0, 0, 1, 0], [], []>} : vector<16x128xf32>, vector<128x128xf32>, vector<16x128xf32> -> vector<16x128xf32>
      %c0_15 = arith.constant 0 : index
      %c0_16 = arith.constant 0 : index
      %15 = vector.load %arg8[%c0_15, %c0_16] : memref<16x128xf32, #tpu.memory_space<vmem>>, vector<16x128xf32>
      %c0_17 = arith.constant 0 : index
      %c0_18 = arith.constant 0 : index
      %16 = vector.load %arg5[%c0_17, %c0_18] : memref<1x128xf32, #tpu.memory_space<vmem>>, vector<1x128xf32>
      %17 = vector.broadcast %16 : vector<1x128xf32> to vector<16x128xf32>
      %18 = arith.addf %15, %17 : vector<16x128xf32>
      %cst_19 = arith.constant 2.000000e+00 : f32
      %19 = vector.broadcast %cst_19 : f32 to vector<16x128xf32>
      %20 = arith.mulf %14, %19 : vector<16x128xf32>
      %21 = arith.addf %18, %20 : vector<16x128xf32>
      %c0_20 = arith.constant 0 : index
      %c0_21 = arith.constant 0 : index
      %22 = vector.load %arg8[%c0_20, %c0_21] : memref<16x128xf32, #tpu.memory_space<vmem>>, vector<16x128xf32>
      tpu.vector_store %arg8[%c0_20, %c0_21], %21 {strides = array<i32>} : memref<16x128xf32, #tpu.memory_space<vmem>>, vector<16x128xf32>,
    } else {
    }
    return
  }
  func.func @transform_0(%arg0: i32, %arg1: i32, %arg2: i32) -> (i32, i32) {
    %c0_i32 = arith.constant 0 : i32
    return %arg0, %arg2 : i32, i32
  }
  func.func @transform_1(%arg0: i32, %arg1: i32, %arg2: i32) -> (i32, i32) {
    %c0_i32 = arith.constant 0 : i32
    return %arg1, %arg2 : i32, i32
  }
  func.func @transform_2(%arg0: i32, %arg1: i32, %arg2: i32) -> (i32, i32) {
    %c0_i32 = arith.constant 0 : i32
    %c0_i32_0 = arith.constant 0 : i32
    return %c0_i32, %arg1 : i32, i32
  }
  func.func @transform_3(%arg0: i32, %arg1: i32, %arg2: i32) -> (i32, i32) {
    %c0_i32 = arith.constant 0 : i32
    %c0_i32_0 = arith.constant 0 : i32
    return %arg0, %c0_i32 : i32, i32
  }
  func.func @transform_4(%arg0: i32, %arg1: i32, %arg2: i32) -> (i32, i32) {
    %c0_i32 = arith.constant 0 : i32
    %c0_i32_0 = arith.constant 0 : i32
    return %arg1, %c0_i32 : i32, i32
  }
  func.func @transform_5(%arg0: i32, %arg1: i32, %arg2: i32) -> (i32, i32) {
    %c0_i32 = arith.constant 0 : i32
    return %arg0, %arg1 : i32, i32
  }
}

</mosaic_0001>

<llo_original>
// kernel: forward.1
$region0: #{forward.1}
  #allocation0 [shape = 'u32[]', space=smem, size = 0x4, offset = 0x4, fixed_abs, tag = 'smem constant byte address 0x4 - core index']
  #allocation1 [shape = 'u32[72,128]{1,0:T(1,128)}', space=vmem, size = 0x9000, scoped, tag = 'internal scratch']
  %s0 = inlined_call_operand.vmem [shape: f32[16,128], index: 0, kind: input, shape index: {}]
  %s1 = inlined_call_operand.hbm [shape: f32[128,128], index: 1, kind: input, shape index: {}]
  %s2 = inlined_call_operand.vmem [shape: f32[1,128], index: 2, kind: input, shape index: {}]
  %s3 = inlined_call_operand.vmem [shape: f32[16,128], index: 3, kind: input, shape index: {}]
  %s4 = inlined_call_operand.hbm [shape: f32[128,128], index: 4, kind: input, shape index: {}]
  %s5 = inlined_call_operand.vmem [shape: f32[16,128], index: 5, kind: output, shape index: {}]
  %s6 = sld [smem:[#allocation0]]
  $region46: #{forward.1} parent=0
    _
  %s8 = ssub.s32 1, %s6
  %s9 = scalar_select 0, %s8, %s6
  $region1: #{forward.1} parent=0
    #allocation2 [shape = 'u8[65536]{0}', space=vmem, size = 0x10000, scoped, tag = 'input window, operand 1, single buffered']
    #allocation3 [shape = 's32[1]{0}', space=sflag, size = 0x4, scoped, tag = 'scoped memory for forward.1']
    #allocation4 [shape = 'u8[65536]{0}', space=vmem, size = 0x10000, scoped, tag = 'input window, operand 4, single buffered']
    #allocation5 [shape = 's32[1]{0}', space=sflag, size = 0x4, scoped, tag = 'scoped memory for forward.1']
    %10 = vsyncpa [#allocation3], 0
    %11 = vsyncpa [#allocation5], 0
    // Predicated region
    $region2: #{forward.1} parent=1 // pred_check
      _
    $region3: #{forward.1} parent=1 // pred_check_branch
      %13 = sbr.rel (0) target = $region5
    $region4: #{forward.1} parent=1 // pred_region
      _
    $region5: #{forward.1} parent=1 // pred_fallthru
      _
    // Predicated region
    $region6: #{forward.1} parent=1 // pred_check
      _
    $region7: #{forward.1} parent=1 // pred_check_branch
      %15 = sbr.rel (0) target = $region9
    $region8: #{forward.1} parent=1 // pred_region
      %17 = vsyncadd [#allocation3], 0
      %s18 = sshll.u32 %s1, 4
      %s19 = int_to_ptr.hbm [resolvable:$true] %s18
      %s20 = sshll.u32 [#allocation2], 4
      %s21 = int_to_ptr.vmem [resolvable:$true] %s20
      %26 = dma.hbm_to_vmem [thread:$0]  %s19, 2048, %s21, [#allocation3], 128, 128, 8
    $region9: #{forward.1} parent=1 // pred_fallthru
      _
    // Predicated region
    $region10: #{forward.1} parent=1 // pred_check
      _
    $region11: #{forward.1} parent=1 // pred_check_branch
      %28 = sbr.rel (0) target = $region13
    $region12: #{forward.1} parent=1 // pred_region
      _
    $region13: #{forward.1} parent=1 // pred_fallthru
      _
    // Predicated region
    $region14: #{forward.1} parent=1 // pred_check
      _
    $region15: #{forward.1} parent=1 // pred_check_branch
      %30 = sbr.rel (0) target = $region17
    $region16: #{forward.1} parent=1 // pred_region
      _
    $region17: #{forward.1} parent=1 // pred_fallthru
      _
    // Predicated region
    $region18: #{forward.1} parent=1 // pred_check
      _
    $region19: #{forward.1} parent=1 // pred_check_branch
      %32 = sbr.rel (0) target = $region21
    $region20: #{forward.1} parent=1 // pred_region
      %34 = vsyncadd [#allocation5], 0
      %s35 = sshll.u32 %s4, 4
      %s36 = int_to_ptr.hbm [resolvable:$true] %s35
      %s37 = sshll.u32 [#allocation4], 4
      %s38 = int_to_ptr.vmem [resolvable:$true] %s37
      %43 = dma.hbm_to_vmem [thread:$0]  %s36, 2048, %s38, [#allocation5], 128, 128, 8
    $region21: #{forward.1} parent=1 // pred_fallthru
      _
    // Predicated region
    $region22: #{forward.1} parent=1 // pred_check
      _
    $region23: #{forward.1} parent=1 // pred_check_branch
      %45 = sbr.rel (0) target = $region25
    $region24: #{forward.1} parent=1 // pred_region
      %47 = dma.done [#allocation3], 2048
    $region25: #{forward.1} parent=1 // pred_fallthru
      _
    // Predicated region
    $region26: #{forward.1} parent=1 // pred_check
      _
    $region27: #{forward.1} parent=1 // pred_check_branch
      %49 = sbr.rel (0) target = $region29
    $region28: #{forward.1} parent=1 // pred_region
      %51 = dma.done [#allocation5], 2048
    $region29: #{forward.1} parent=1 // pred_fallthru
      _
    %p52 = scmp.eq.s32.totalorder 0, 0
    // Predicated region
    $region30: #{forward.1} parent=1 // pred_check
      %p53 = pneg %p52
    $region31: #{forward.1} parent=1 // pred_check_branch
      %55 = sbr.rel (%p53) target = $region33
    $region32: #{forward.1} parent=1 // pred_region
      %56 = vst [vmem:[%s5] sm:$0xff] 0.0
      %57 = vst [vmem:[%s5 + $0x8] sm:$0xff] 0.0
    $region33: #{forward.1} parent=1 // pred_fallthru
      _
    %v58 = vld [vmem:[%s5] sm:$0xff]
    %v59 = vld [vmem:[%s5 + $0x8] sm:$0xff]
    %v60 = vld [vmem:[%s0] sm:$0xff]
    %v61 = vld [vmem:[%s0 + $0x8] sm:$0xff]
    %v62 = vld [vmem:[#allocation2] sm:$0xff]
    %v63 = vld [vmem:[#allocation2 + $0x8] sm:$0xff]
    %v64 = vld [vmem:[#allocation2 + $0x10] sm:$0xff]
    %v65 = vld [vmem:[#allocation2 + $0x18] sm:$0xff]
    %v66 = vld [vmem:[#allocation2 + $0x20] sm:$0xff]
    %v67 = vld [vmem:[#allocation2 + $0x28] sm:$0xff]
    %v68 = vld [vmem:[#allocation2 + $0x30] sm:$0xff]
    %v69 = vld [vmem:[#allocation2 + $0x38] sm:$0xff]
    %v70 = vld [vmem:[#allocation2 + $0x40] sm:$0xff]
    %v71 = vld [vmem:[#allocation2 + $0x48] sm:$0xff]
    %v72 = vld [vmem:[#allocation2 + $0x50] sm:$0xff]
    %v73 = vld [vmem:[#allocation2 + $0x58] sm:$0xff]
    %v74 = vld [vmem:[#allocation2 + $0x60] sm:$0xff]
    %v75 = vld [vmem:[#allocation2 + $0x68] sm:$0xff]
    %v76 = vld [vmem:[#allocation2 + $0x70] sm:$0xff]
    %v77 = vld [vmem:[#allocation2 + $0x78] sm:$0xff]
    %78 = vmatpush.xpose.msra.mxu0 %v77
    %79 = vmatpush.xpose.msra.mxu0 %v76
    %80 = vmatpush.xpose.msra.mxu0 %v75
    %81 = vmatpush.xpose.msra.mxu0 %v74
    %82 = vmatpush.xpose.msra.mxu0 %v73
    %83 = vmatpush.xpose.msra.mxu0 %v72
    %84 = vmatpush.xpose.msra.mxu0 %v71
    %85 = vmatpush.xpose.msra.mxu0 %v70
    %86 = vmatpush.xpose.msra.mxu0 %v69
    %87 = vmatpush.xpose.msra.mxu0 %v68
    %88 = vmatpush.xpose.msra.mxu0 %v67
    %89 = vmatpush.xpose.msra.mxu0 %v66
    %90 = vmatpush.xpose.msra.mxu0 %v65
    %91 = vmatpush.xpose.msra.mxu0 %v64
    %92 = vmatpush.xpose.msra.mxu0 %v63
    %93 = vmatpush.xpose.msra.mxu0 %v62
    %94 = vmatmul.f32.gmra.mxu0 %v60
    %v95 = vpop.f32.mrf.mxu0
    %v96 = vadd.f32 0.0, %v95
    %97 = vmatmul.f32.gmra.mxu0 %v61
    %v98 = vpop.f32.mrf.mxu0
    %v99 = vadd.f32 0.0, %v98
    %100 = vdwg.mxu0
    %v101 = vadd.f32 %v58, %v96
    %v102 = vadd.f32 %v59, %v99
    %103 = vst [vmem:[%s5] sm:$0xff] %v101
    %104 = vst [vmem:[%s5 + $0x8] sm:$0xff] %v102
    // Predicated region
    $region34: #{forward.1} parent=1 // pred_check
      %p105 = pneg %p52
    $region35: #{forward.1} parent=1 // pred_check_branch
      %107 = sbr.rel (%p105) target = $region37
    $region36: #{forward.1} parent=1 // pred_region
      %v108 = vld [vmem:[%s3] sm:$0xff]
      %v109 = vld [vmem:[%s3 + $0x8] sm:$0xff]
      %v110 = vld [vmem:[#allocation4] sm:$0xff]
      %v111 = vld [vmem:[#allocation4 + $0x8] sm:$0xff]
      %v112 = vld [vmem:[#allocation4 + $0x10] sm:$0xff]
      %v113 = vld [vmem:[#allocation4 + $0x18] sm:$0xff]
      %v114 = vld [vmem:[#allocation4 + $0x20] sm:$0xff]
      %v115 = vld [vmem:[#allocation4 + $0x28] sm:$0xff]
      %v116 = vld [vmem:[#allocation4 + $0x30] sm:$0xff]
      %v117 = vld [vmem:[#allocation4 + $0x38] sm:$0xff]
      %v118 = vld [vmem:[#allocation4 + $0x40] sm:$0xff]
      %v119 = vld [vmem:[#allocation4 + $0x48] sm:$0xff]
      %v120 = vld [vmem:[#allocation4 + $0x50] sm:$0xff]
      %v121 = vld [vmem:[#allocation4 + $0x58] sm:$0xff]
      %v122 = vld [vmem:[#allocation4 + $0x60] sm:$0xff]
      %v123 = vld [vmem:[#allocation4 + $0x68] sm:$0xff]
      %v124 = vld [vmem:[#allocation4 + $0x70] sm:$0xff]
      %v125 = vld [vmem:[#allocation4 + $0x78] sm:$0xff]
      %126 = vmatpush.xpose.msra.mxu0 %v125
      %127 = vmatpush.xpose.msra.mxu0 %v124
      %128 = vmatpush.xpose.msra.mxu0 %v123
      %129 = vmatpush.xpose.msra.mxu0 %v122
      %130 = vmatpush.xpose.msra.mxu0 %v121
      %131 = vmatpush.xpose.msra.mxu0 %v120
      %132 = vmatpush.xpose.msra.mxu0 %v119
      %133 = vmatpush.xpose.msra.mxu0 %v118
      %134 = vmatpush.xpose.msra.mxu0 %v117
      %135 = vmatpush.xpose.msra.mxu0 %v116
      %136 = vmatpush.xpose.msra.mxu0 %v115
      %137 = vmatpush.xpose.msra.mxu0 %v114
      %138 = vmatpush.xpose.msra.mxu0 %v113
      %139 = vmatpush.xpose.msra.mxu0 %v112
      %140 = vmatpush.xpose.msra.mxu0 %v111
      %141 = vmatpush.xpose.msra.mxu0 %v110
      %142 = vmatmul.f32.gmra.mxu0 %v108
      %v143 = vpop.f32.mrf.mxu0
      %v144 = vadd.f32 0.0, %v143
      %145 = vmatmul.f32.gmra.mxu0 %v109
      %v146 = vpop.f32.mrf.mxu0
      %v147 = vadd.f32 0.0, %v146
      %148 = vdwg.mxu0
      %v149 = vld [vmem:[%s5] sm:$0xff]
      %v150 = vld [vmem:[%s5 + $0x8] sm:$0xff]
      %v151 = vld [vmem:[%s2] sm:$0x1]
      %v153 = vperm.slane %v151, 0
      %v155 = vadd.f32 %v149, %v153
      %v156 = vadd.f32 %v150, %v153
      %v157 = vmul.f32 %v144, 2.0
      %v158 = vmul.f32 %v147, 2.0
      %v159 = vadd.f32 %v155, %v157
      %v160 = vadd.f32 %v156, %v158
      %161 = vst [vmem:[%s5] sm:$0xff] %v159
      %162 = vst [vmem:[%s5 + $0x8] sm:$0xff] %v160
    $region37: #{forward.1} parent=1 // pred_fallthru
      _
    // Predicated region
    $region38: #{forward.1} parent=1 // pred_check
      _
    $region39: #{forward.1} parent=1 // pred_check_branch
      %164 = sbr.rel (0) target = $region41
    $region40: #{forward.1} parent=1 // pred_region
      _
    $region41: #{forward.1} parent=1 // pred_fallthru
      _
    // Predicated region
    $region42: #{forward.1} parent=1 // pred_check
      _
    $region43: #{forward.1} parent=1 // pred_check_branch
      %166 = sbr.rel (0) target = $region45
    $region44: #{forward.1} parent=1 // pred_region
      _
    $region45: #{forward.1} parent=1 // pred_fallthru
      _
    %167 = vsyncpa [#allocation3], 1
    %168 = vsyncpa [#allocation5], 1

</llo_original>
